<compile_context>
chip_gen: v5e
topology: v5e:2x2
jax: 0.10.0
libtpu: 0.0.40
codegen_flags: <defaults>
</compile_context>

<pallas_src>
import jax
import jax.numpy as jnp
from jax import lax
from jax.experimental import pallas as pl
from jax.experimental.pallas import tpu as pltpu


# --------------------------------- kernel ------------------------------------

def bert_self_output_kernel(h_ref, resid_ref, w_ref, p_ref, out_ref):
    # h_ref, resid_ref, out_ref: (TM, H) bf16; w_ref: (H, H) bf16
    # p_ref: (3, H) f32 -> rows = [bias, gamma, beta]
    x = jnp.dot(h_ref[...], w_ref[...], preferred_element_type=jnp.float32)
    x = x + p_ref[0:1, :] + resid_ref[...].astype(jnp.float32)

    # BERT-style LayerNorm (epsilon inside the square root), stats in f32,
    # rsqrt on the EUP.
    u = jnp.mean(x, axis=-1, keepdims=True)
    d = x - u
    s = jnp.mean(d * d, axis=-1, keepdims=True)
    xn = d * lax.rsqrt(s + 1e-12)
    out_ref[...] = (p_ref[1:2, :] * xn + p_ref[2:3, :]).astype(out_ref.dtype)


# --------------------------------- wrapper -----------------------------------

def _round_up(x, m):
    return ((x + m - 1) // m) * m


def bert_self_output(hidden_states, input_tensor, params, *, block_rows=512):
    """hidden_states/input_tensor: (n, S, H). Returns (n, S, H) in bf16."""
    n, S, H = hidden_states.shape
    assert H % 128 == 0, "hidden_size must be a multiple of 128 (lane-dense)"
    M = n * S

    SUBLANE = 16  # bf16 packs 16 rows per sublane tile

    # Fold batch+seq into the matmul M-dimension; stream activations in bf16.
    h2 = hidden_states.reshape(M, H)
    r2 = input_tensor.reshape(M, H)
    if h2.dtype != jnp.bfloat16:
        h2 = h2.astype(jnp.bfloat16)
    if r2.dtype != jnp.bfloat16:
        r2 = r2.astype(jnp.bfloat16)

    # Row tile: multiple of 16, padded M (no masked sublane stores), and keep
    # at least 2 grid steps when possible so v7x's 2 TensorCores both work.
    tm = min(block_rows, _round_up(M, SUBLANE))
    tm = max(SUBLANE, (tm // SUBLANE) * SUBLANE)
    if _round_up(M, tm) == tm and tm >= 2 * SUBLANE:
        tm = _round_up(tm // 2, SUBLANE)
    M_pad = _round_up(M, tm)
    grid = (M_pad // tm,)

    if M_pad != M:
        pad = ((0, M_pad - M), (0, 0))
        h2 = jnp.pad(h2, pad)
        r2 = jnp.pad(r2, pad)

    # Weight in bf16 (native MXU path); (in, out) layout so the kernel does
    # x @ W directly.  Small params stay f32 and ride in one (3, H) block.
    w = params["w"]
    if w.dtype != jnp.bfloat16:
        w = w.astype(jnp.bfloat16)
    p = jnp.stack(
        [params["b"].astype(jnp.float32),
         params["gamma"].astype(jnp.float32),
         params["beta"].astype(jnp.float32)],
        axis=0,
    )  # (3, H)

    def row_map(i):
        return (i, 0)

    def const_map(i):
        return (0, 0)

    out = pl.pallas_call(
        bert_self_output_kernel,
        out_shape=jax.ShapeDtypeStruct((M_pad, H), jnp.bfloat16),
        grid=grid,
        in_specs=[
            pl.BlockSpec((tm, H), row_map),                 # hidden rows (bf16)
            pl.BlockSpec((tm, H), row_map),                 # residual rows
            pl.BlockSpec((H, H), const_map,
                         pipeline_mode=pl.Buffered(1)),     # dense weight
            pl.BlockSpec((3, H), const_map,
                         pipeline_mode=pl.Buffered(1)),     # bias/gamma/beta
        ],
        out_specs=pl.BlockSpec((tm, H), row_map),
        compiler_params=pltpu.CompilerParams(
            dimension_semantics=("parallel",),
            vmem_limit_bytes=64 * 1024 * 1024),
    )(h2, r2, w, p)

    return out[:M].reshape(n, S, H)


# ------------------------- pure-JAX reference (check) -------------------------

def bert_self_output_ref(hidden_states, input_tensor, params):
    x = jnp.einsum("nsh,hk->nsk",
                   hidden_states.astype(jnp.float32),
                   params["w"].astype(jnp.float32))
    x = x + params["b"].astype(jnp.float32)
    x = x + input_tensor.astype(jnp.float32)
    u = jnp.mean(x, axis=-1, keepdims=True)
    s = jnp.mean((x - u) ** 2, axis=-1, keepdims=True)
    xn = (x - u) / jnp.sqrt(s + 1e-12)
    return params["gamma"] * xn + params["beta"]


# ----------------------------------- main -------------------------------------

if __name__ == "__main__":
    key = jax.random.PRNGKey(0)
    n, S, H = 2, 16, 128    # batch=2, seq=16, hidden=128 (lane-dense last dim)

    k_h, k_r, k_w, k_b = jax.random.split(key, 4)
    hidden_states = jax.random.normal(k_h, (n, S, H), jnp.float32).astype(
        jnp.bfloat16)
    input_tensor = jax.random.normal(k_r, (n, S, H), jnp.float32).astype(
        jnp.bfloat16)
    params = {
        "w": (jax.random.normal(k_w, (H, H), jnp.float32) * 0.02).astype(
            jnp.bfloat16),                                   # (in, out) layout
        "b": jax.random.normal(k_b, (H,), jnp.float32) * 0.02,
        "gamma": jnp.ones((H,), jnp.float32),
        "beta": jnp.zeros((H,), jnp.float32),
    }

    res = bert_self_output(hidden_states, input_tensor, params)
    res = jax.block_until_ready(res)

    ref = bert_self_output_ref(hidden_states, input_tensor, params)
    if not jnp.allclose(res.astype(jnp.float32), ref, rtol=2e-2, atol=2e-2):
        raise AssertionError("Pallas kernel output does not match JAX reference")

    print("KERNEL_OK")
</pallas_src>

<mosaic_0001>
module attributes {stable_mosaic.version = 11 : i64} {
  func.func @bert_self_output_kernel(%arg0: i32, %arg1: memref<16x128xbf16, #tpu.memory_space<vmem>>, %arg2: memref<16x128xbf16, #tpu.memory_space<vmem>>, %arg3: memref<128x128xbf16, #tpu.memory_space<vmem>>, %arg4: memref<3x128xf32, #tpu.memory_space<vmem>>, %arg5: memref<16x128xbf16, #tpu.memory_space<vmem>>) attributes {dimension_semantics = [#tpu.dimension_semantics<parallel>], iteration_bounds = array<i64: 2>, scalar_prefetch = 0 : i64, scratch_operands = 0 : i64, tpu.core_type = #tpu.core_type<tc>, window_params = [{transform_indices = @transform_0, window_bounds = array<i64: 16, 128>}, {transform_indices = @transform_1, window_bounds = array<i64: 16, 128>}, {pipeline_mode = #tpu.pipeline_mode<synchronous>, transform_indices = @transform_2, window_bounds = array<i64: 128, 128>}, {pipeline_mode = #tpu.pipeline_mode<synchronous>, transform_indices = @transform_3, window_bounds = array<i64: 3, 128>}, {transform_indices = @transform_4, window_bounds = array<i64: 16, 128>}]} {
    %c0 = arith.constant 0 : index
    %c0_0 = arith.constant 0 : index
    %0 = vector.load %arg1[%c0, %c0_0] : memref<16x128xbf16, #tpu.memory_space<vmem>>, vector<16x128xbf16>
    %c0_1 = arith.constant 0 : index
    %c0_2 = arith.constant 0 : index
    %1 = vector.load %arg3[%c0_1, %c0_2] : memref<128x128xbf16, #tpu.memory_space<vmem>>, vector<128x128xbf16>
    %cst = arith.constant dense<0.000000e+00> : vector<16x128xf32>
    %2 = tpu.matmul %0, %1, %cst {dimension_numbers = #tpu.dot_dimension_numbers<[1], [0], [0], [1], [0, 0, 1, 1], [], []>} : vector<16x128xbf16>, vector<128x128xbf16>, vector<16x128xf32> -> vector<16x128xf32>
    %c0_3 = arith.constant 0 : index
    %c0_4 = arith.constant 0 : index
    %3 = vector.load %arg4[%c0_3, %c0_4] : memref<3x128xf32, #tpu.memory_space<vmem>>, vector<1x128xf32>
    %4 = vector.broadcast %3 : vector<1x128xf32> to vector<16x128xf32>
    %5 = arith.addf %2, %4 : vector<16x128xf32>
    %c0_5 = arith.constant 0 : index
    %c0_6 = arith.constant 0 : index
    %6 = vector.load %arg2[%c0_5, %c0_6] : memref<16x128xbf16, #tpu.memory_space<vmem>>, vector<16x128xbf16>
    %7 = arith.extf %6 : vector<16x128xbf16> to vector<16x128xf32>
    %8 = arith.addf %5, %7 : vector<16x128xf32>
    %cst_7 = arith.constant dense<0.000000e+00> : vector<16xf32>
    %9 = vector.multi_reduction <add>, %8, %cst_7 [1] : vector<16x128xf32> to vector<16xf32>
    %10 = vector.shape_cast %9 : vector<16xf32> to vector<16x1xf32>
    %cst_8 = arith.constant 1.280000e+02 : f32
    %11 = vector.broadcast %cst_8 : f32 to vector<16x1xf32>
    %12 = arith.divf %10, %11 : vector<16x1xf32>
    %13 = vector.broadcast %12 : vector<16x1xf32> to vector<16x128xf32>
    %14 = arith.subf %8, %13 : vector<16x128xf32>
    %15 = arith.mulf %14, %14 : vector<16x128xf32>
    %cst_9 = arith.constant dense<0.000000e+00> : vector<16xf32>
    %16 = vector.multi_reduction <add>, %15, %cst_9 [1] : vector<16x128xf32> to vector<16xf32>
    %17 = vector.shape_cast %16 : vector<16xf32> to vector<16x1xf32>
    %cst_10 = arith.constant 1.280000e+02 : f32
    %18 = vector.broadcast %cst_10 : f32 to vector<16x1xf32>
    %19 = arith.divf %17, %18 : vector<16x1xf32>
    %cst_11 = arith.constant 9.99999996E-13 : f32
    %20 = vector.broadcast %cst_11 : f32 to vector<16x1xf32>
    %21 = arith.addf %19, %20 : vector<16x1xf32>
    %22 = math.rsqrt %21 : vector<16x1xf32>
    %23 = vector.broadcast %22 : vector<16x1xf32> to vector<16x128xf32>
    %24 = arith.mulf %14, %23 : vector<16x128xf32>
    %c1 = arith.constant 1 : index
    %c0_12 = arith.constant 0 : index
    %25 = vector.load %arg4[%c1, %c0_12] : memref<3x128xf32, #tpu.memory_space<vmem>>, vector<1x128xf32>
    %26 = vector.broadcast %25 : vector<1x128xf32> to vector<16x128xf32>
    %27 = arith.mulf %26, %24 : vector<16x128xf32>
    %c2 = arith.constant 2 : index
    %c0_13 = arith.constant 0 : index
    %28 = vector.load %arg4[%c2, %c0_13] : memref<3x128xf32, #tpu.memory_space<vmem>>, vector<1x128xf32>
    %29 = vector.broadcast %28 : vector<1x128xf32> to vector<16x128xf32>
    %30 = arith.addf %27, %29 : vector<16x128xf32>
    %31 = arith.truncf %30 : vector<16x128xf32> to vector<16x128xbf16>
    %c0_14 = arith.constant 0 : index
    %c0_15 = arith.constant 0 : index
    %32 = vector.load %arg5[%c0_14, %c0_15] : memref<16x128xbf16, #tpu.memory_space<vmem>>, vector<16x128xbf16>
    tpu.vector_store %arg5[%c0_14, %c0_15], %31 {strides = array<i32>} : memref<16x128xbf16, #tpu.memory_space<vmem>>, vector<16x128xbf16>,
    return
  }
  func.func @transform_0(%arg0: i32) -> (i32, i32) {
    %c0_i32 = arith.constant 0 : i32
    %c0_i32_0 = arith.constant 0 : i32
    return %arg0, %c0_i32 : i32, i32
  }
  func.func @transform_1(%arg0: i32) -> (i32, i32) {
    %c0_i32 = arith.constant 0 : i32
    %c0_i32_0 = arith.constant 0 : i32
    return %arg0, %c0_i32 : i32, i32
  }
  func.func @transform_2(%arg0: i32) -> (i32, i32) {
    %c0_i32 = arith.constant 0 : i32
    %c0_i32_0 = arith.constant 0 : i32
    %c0_i32_1 = arith.constant 0 : i32
    return %c0_i32, %c0_i32_0 : i32, i32
  }
  func.func @transform_3(%arg0: i32) -> (i32, i32) {
    %c0_i32 = arith.constant 0 : i32
    %c0_i32_0 = arith.constant 0 : i32
    %c0_i32_1 = arith.constant 0 : i32
    return %c0_i32, %c0_i32_0 : i32, i32
  }
  func.func @transform_4(%arg0: i32) -> (i32, i32) {
    %c0_i32 = arith.constant 0 : i32
    %c0_i32_0 = arith.constant 0 : i32
    return %arg0, %c0_i32 : i32, i32
  }
}

</mosaic_0001>

<llo_original>
// kernel: tpu_custom_call.1
$region0: #{tpu_custom_call.1}
  #allocation0 [shape = 'u32[]', space=smem, size = 0x4, offset = 0x4, fixed_abs, tag = 'smem constant byte address 0x4 - core index']
  #allocation1 [shape = 'u32[72,128]{1,0:T(1,128)}', space=vmem, size = 0x9000, scoped, tag = 'internal scratch']
  %s0 = inlined_call_operand.hbm [shape: bf16[32,128], index: 0, kind: input, shape index: {}]
  %s1 = inlined_call_operand.hbm [shape: bf16[32,128], index: 1, kind: input, shape index: {}]
  %s2 = inlined_call_operand.hbm [shape: bf16[128,128], index: 2, kind: input, shape index: {}]
  %s3 = inlined_call_operand.hbm [shape: f32[3,128], index: 3, kind: input, shape index: {}]
  %s4 = inlined_call_operand.hbm [shape: bf16[32,128], index: 4, kind: output, shape index: {}]
  %s5 = sld [smem:[#allocation0]]
  $region65: #{tpu_custom_call.1} parent=0
    _
  %s7 = ssub.s32 1, %s5
  %s8 = scalar_select 0, %s7, %s5
  $region1: #{tpu_custom_call.1} parent=0
    #allocation2 [shape = 'u8[8192]{0}', space=vmem, size = 0x2000, scoped, tag = 'input window, operand 0']
    #allocation3 [shape = 's32[2]{0}', space=sflag, size = 0x8, scoped, tag = 'scoped memory for tpu_custom_call.1']
    #allocation4 [shape = 's32[2]{0}', space=sflag, size = 0x8, scoped, tag = 'scoped memory for tpu_custom_call.1']
    #allocation5 [shape = 'u8[8192]{0}', space=vmem, size = 0x2000, scoped, tag = 'input window, operand 1']
    #allocation6 [shape = 's32[2]{0}', space=sflag, size = 0x8, scoped, tag = 'scoped memory for tpu_custom_call.1']
    #allocation7 [shape = 'u8[32768]{0}', space=vmem, size = 0x8000, scoped, tag = 'input window, operand 2, single buffered']
    #allocation8 [shape = 'u8[2048]{0}', space=vmem, size = 0x800, scoped, tag = 'input window, operand 3, single buffered']
    #allocation9 [shape = 's32[1]{0}', space=sflag, size = 0x4, scoped, tag = 'scoped memory for tpu_custom_call.1']
    #allocation10 [shape = 'u8[8192]{0}', space=vmem, size = 0x2000, scoped, tag = 'output window, operand 0']
    %9 = vsyncpa [#allocation3], 0
    %s10 = scalar_lea.sflag [#allocation3], 1
    %11 = vsyncpa %s10, 0
    %12 = vsyncpa [#allocation6], 0
    %s13 = scalar_lea.sflag [#allocation6], 1
    %14 = vsyncpa %s13, 0
    %15 = vsyncpa [#allocation9], 0
    %16 = vsyncpa [#allocation4], 0
    %s17 = scalar_lea.sflag [#allocation4], 1
    %18 = vsyncpa %s17, 0
    loop: start=0, step=1, limit=4
    $region2: #{tpu_custom_call.1} parent=1 // loop_pre_header
      _
    $region3: #{tpu_custom_call.1} parent=1 // loop_header
      %s20 = sphi 0, %s24
      %p21 = scmp.ge.s32.totalorder %s20, 4
      %s30 = sphi 0, %s32
      %s33 = sphi 0, %s30
      %s34 = sphi 0, %s33
      %s50 = sphi 0, %s34
      %s56 = sphi 0, %s58
      %s59 = sphi 0, %s56
      %s60 = sphi 0, %s59
      %s76 = sphi 0, %s60
      %s80 = sphi 0, %s80
      %s82 = sphi 0, %s80
      %s83 = sphi 0, %s82
      %s97 = sphi 0, %s83
      %s101 = sphi 0, %s101
      %s103 = sphi 0, %s101
      %s104 = sphi 0, %s103
      %s118 = sphi 0, %s104
      %s124 = sphi 0, %s126
      %s127 = sphi 0, %s124
      %s128 = sphi 0, %s127
      %s144 = sphi 0, %s128
    $region4: #{tpu_custom_call.1} parent=1 // loop_header_branch
      %23 = sbr.rel (%p21) target = $region8
    $region5: #{tpu_custom_call.1} parent=1 // loop_body
      %s25 = ssub.s32 %s20, 1
      %s26 = ssub.s32 %s20, 2
      %s27 = sadd.s32 %s20, 1
      %s28 = ssub.s32 %s20, %s27
      %p29 = scmp.eq.s32.totalorder %s28, 0
      %s31 = sadd.s32 %s30, 1
      %s32 = scalar_select %p29, %s30, %s31
      %p35 = pneg %p29
      %p36 = scmp.eq.s32.totalorder %s20, 1
      %p37 = por %p35, %p36
      %p38 = scmp.ne.s32.totalorder %s30, %s33
      %p39 = scmp.eq.s32.totalorder %s20, 0
      %p40 = por %p38, %p39
      %p41 = scmp.ne.s32.totalorder %s30, %s33
      %p42 = scmp.eq.s32.totalorder %s25, 1
      %p43 = por %p41, %p42
      %p44 = scmp.ne.s32.totalorder %s33, %s34
      %p45 = scmp.eq.s32.totalorder %s25, 0
      %p46 = por %p44, %p45
      %p47 = scmp.ne.s32.totalorder %s33, %s34
      %p48 = scmp.eq.s32.totalorder %s26, 1
      %p49 = por %p47, %p48
      %p51 = scmp.ne.s32.totalorder %s34, %s50
      %p52 = scmp.eq.s32.totalorder %s26, 0
      %p53 = por %p51, %p52
      %s54 = ssub.s32 %s20, %s27
      %p55 = scmp.eq.s32.totalorder %s54, 0
      %s57 = sadd.s32 %s56, 1
      %s58 = scalar_select %p55, %s56, %s57
      %p61 = pneg %p55
      %p62 = scmp.eq.s32.totalorder %s20, 1
      %p63 = por %p61, %p62
      %p64 = scmp.ne.s32.totalorder %s56, %s59
      %p65 = scmp.eq.s32.totalorder %s20, 0
      %p66 = por %p64, %p65
      %p67 = scmp.ne.s32.totalorder %s56, %s59
      %p68 = scmp.eq.s32.totalorder %s25, 1
      %p69 = por %p67, %p68
      %p70 = scmp.ne.s32.totalorder %s59, %s60
      %p71 = scmp.eq.s32.totalorder %s25, 0
      %p72 = por %p70, %p71
      %p73 = scmp.ne.s32.totalorder %s59, %s60
      %p74 = scmp.eq.s32.totalorder %s26, 1
      %p75 = por %p73, %p74
      %p77 = scmp.ne.s32.totalorder %s60, %s76
      %p78 = scmp.eq.s32.totalorder %s26, 0
      %p79 = por %p77, %p78
      %s81 = sadd.s32 %s80, 1
      %p84 = scmp.eq.s32.totalorder %s20, 1
      %p85 = scmp.ne.s32.totalorder %s80, %s82
      %p86 = scmp.eq.s32.totalorder %s20, 0
      %p87 = por %p85, %p86
      %p88 = scmp.ne.s32.totalorder %s80, %s82
      %p89 = scmp.eq.s32.totalorder %s25, 1
      %p90 = por %p88, %p89
      %p91 = scmp.ne.s32.totalorder %s82, %s83
      %p92 = scmp.eq.s32.totalorder %s25, 0
      %p93 = por %p91, %p92
      %p94 = scmp.ne.s32.totalorder %s82, %s83
      %p95 = scmp.eq.s32.totalorder %s26, 1
      %p96 = por %p94, %p95
      %p98 = scmp.ne.s32.totalorder %s83, %s97
      %p99 = scmp.eq.s32.totalorder %s26, 0
      %p100 = por %p98, %p99
      %s102 = sadd.s32 %s101, 1
      %p105 = scmp.eq.s32.totalorder %s20, 1
      %p106 = scmp.ne.s32.totalorder %s101, %s103
      %p107 = scmp.eq.s32.totalorder %s20, 0
      %p108 = por %p106, %p107
      %p109 = scmp.ne.s32.totalorder %s101, %s103
      %p110 = scmp.eq.s32.totalorder %s25, 1
      %p111 = por %p109, %p110
      %p112 = scmp.ne.s32.totalorder %s103, %s104
      %p113 = scmp.eq.s32.totalorder %s25, 0
      %p114 = por %p112, %p113
      %p115 = scmp.ne.s32.totalorder %s103, %s104
      %p116 = scmp.eq.s32.totalorder %s26, 1
      %p117 = por %p115, %p116
      %p119 = scmp.ne.s32.totalorder %s104, %s118
      %p120 = scmp.eq.s32.totalorder %s26, 0
      %p121 = por %p119, %p120
      %s122 = ssub.s32 %s20, %s27
      %p123 = scmp.eq.s32.totalorder %s122, 0
      %s125 = sadd.s32 %s124, 1
      %s126 = scalar_select %p123, %s124, %s125
      %p129 = pneg %p123
      %p130 = scmp.eq.s32.totalorder %s20, 1
      %p131 = por %p129, %p130
      %p132 = scmp.ne.s32.totalorder %s124, %s127
      %p133 = scmp.eq.s32.totalorder %s20, 0
      %p134 = por %p132, %p133
      %p135 = scmp.ne.s32.totalorder %s124, %s127
      %p136 = scmp.eq.s32.totalorder %s25, 1
      %p137 = por %p135, %p136
      %p138 = scmp.ne.s32.totalorder %s127, %s128
      %p139 = scmp.eq.s32.totalorder %s25, 0
      %p140 = por %p138, %p139
      %p141 = scmp.ne.s32.totalorder %s127, %s128
      %p142 = scmp.eq.s32.totalorder %s26, 1
      %p143 = por %p141, %p142
      %p145 = scmp.ne.s32.totalorder %s128, %s144
      %p146 = scmp.eq.s32.totalorder %s26, 0
      %p147 = por %p145, %p146
      %p148 = scmp.le.s32.totalorder 1, %s20
      %p149 = scmp.lt.s32.totalorder %s20, 3
      %p150 = pnand %p148, %p149
      %p151 = pneg %p150
      // Predicated region
      $region9: #{tpu_custom_call.1} parent=5 // pred_check
        _
      $region10: #{tpu_custom_call.1} parent=5 // pred_check_branch
        %153 = sbr.rel (%p150) target = $region12
      $region11: #{tpu_custom_call.1} parent=5 // pred_region
        %s154 = ssub.s32 %s20, 1
        // Predicated region
        $region13: #{tpu_custom_call.1} parent=11 // pred_check
          %p155 = pneg %p93
        $region14: #{tpu_custom_call.1} parent=11 // pred_check_branch
          %157 = sbr.rel (%p155) target = $region16
        $region15: #{tpu_custom_call.1} parent=11 // pred_region
          %159 = vsyncadd [#allocation6], 0
          %s160 = sshll.u32 %s2, 4
          %s161 = int_to_ptr.hbm [resolvable:$true] %s160
          %s162 = sshll.u32 [#allocation7], 4
          %s163 = int_to_ptr.vmem [resolvable:$true] %s162
          %168 = dma.hbm_to_vmem [thread:$0]  %s161, 1024, %s163, [#allocation6], 64, 64, 4
        $region16: #{tpu_custom_call.1} parent=11 // pred_fallthru
          _
        // Predicated region
        $region17: #{tpu_custom_call.1} parent=11 // pred_check
          %p169 = pneg %p114
        $region18: #{tpu_custom_call.1} parent=11 // pred_check_branch
          %171 = sbr.rel (%p169) target = $region20
        $region19: #{tpu_custom_call.1} parent=11 // pred_region
          %173 = vsyncadd [#allocation9], 0
          %s175 = sshll.u32 %s3, 4
          %s176 = int_to_ptr.hbm [resolvable:$true] %s175
          %s177 = sshll.u32 [#allocation8], 4
          %s178 = int_to_ptr.vmem [resolvable:$true] %s177
          %180 = dma.hbm_to_vmem [thread:$0]  %s176, 64, %s178, [#allocation9]
        $region20: #{tpu_custom_call.1} parent=11 // pred_fallthru
          _
      $region12: #{tpu_custom_call.1} parent=5 // pred_fallthru
        _
      %p181 = scmp.lt.s32.totalorder %s20, 2
      // Predicated region
      $region21: #{tpu_custom_call.1} parent=5 // pred_check
        %p182 = pneg %p181
      $region22: #{tpu_custom_call.1} parent=5 // pred_check_branch
        %184 = sbr.rel (%p182) target = $region24
      $region23: #{tpu_custom_call.1} parent=5 // pred_region
        // Predicated region
        $region25: #{tpu_custom_call.1} parent=23 // pred_check
          %p185 = pneg %p40
        $region26: #{tpu_custom_call.1} parent=23 // pred_check_branch
          %187 = sbr.rel (%p185) target = $region28
        $region27: #{tpu_custom_call.1} parent=23 // pred_region
          %s188 = sand.u32 %s30, 1
          %s189 = scalar_lea.sflag [#allocation3], %s188
          %s190 = sand.u32 %s30, 1
          %s191 = smul.addr %s190, 8
          %s192 = scalar_lea.vmem [#allocation2], %s191
          %s193 = smul.u32 2, %s20
          %195 = vsyncadd %s189, 0
          %s196 = smul.addr %s193, 4
          %s197 = scalar_lea.hbm %s0, %s196
          %s198 = sshll.u32 %s197, 4
          %s199 = int_to_ptr.hbm [resolvable:$true] %s198
          %s200 = sshll.u32 %s192, 4
          %s201 = int_to_ptr.vmem [resolvable:$true] %s200
          %206 = dma.hbm_to_vmem [thread:$0]  %s199, 128, %s201, %s189, 64, 64, 4
        $region28: #{tpu_custom_call.1} parent=23 // pred_fallthru
          _
        // Predicated region
        $region29: #{tpu_custom_call.1} parent=23 // pred_check
          %p207 = pneg %p66
        $region30: #{tpu_custom_call.1} parent=23 // pred_check_branch
          %209 = sbr.rel (%p207) target = $region32
        $region31: #{tpu_custom_call.1} parent=23 // pred_region
          %s210 = sand.u32 %s20, 1
          %s211 = scalar_lea.sflag [#allocation6], %s210
          %s212 = sand.u32 %s56, 1
          %s213 = smul.addr %s212, 8
          %s214 = scalar_lea.vmem [#allocation5], %s213
          %s215 = smul.u32 2, %s20
          %217 = vsyncadd %s211, 0
          %s218 = smul.addr %s215, 4
          %s219 = scalar_lea.hbm %s1, %s218
          %s220 = sshll.u32 %s219, 4
          %s221 = int_to_ptr.hbm [resolvable:$true] %s220
          %s222 = sshll.u32 %s214, 4
          %s223 = int_to_ptr.vmem [resolvable:$true] %s222
          %228 = dma.hbm_to_vmem [thread:$0]  %s221, 128, %s223, %s211, 64, 64, 4
        $region32: #{tpu_custom_call.1} parent=23 // pred_fallthru
          _
      $region24: #{tpu_custom_call.1} parent=5 // pred_fallthru
        _
      %p229 = scmp.le.s32.totalorder 1, %s20
      %p230 = scmp.lt.s32.totalorder %s20, 3
      %p231 = pnand %p229, %p230
      %p232 = pneg %p231
      // Predicated region
      $region33: #{tpu_custom_call.1} parent=5 // pred_check
        _
      $region34: #{tpu_custom_call.1} parent=5 // pred_check_branch
        %234 = sbr.rel (%p231) target = $region36
      $region35: #{tpu_custom_call.1} parent=5 // pred_region
        %s235 = ssub.s32 %s20, 1
        %s236 = sand.u32 %s33, 1
        %s237 = scalar_lea.sflag [#allocation3], %s236
        %s238 = sand.u32 %s33, 1
        %s239 = smul.addr %s238, 8
        %s240 = scalar_lea.vmem [#allocation2], %s239
        // Predicated region
        $region37: #{tpu_custom_call.1} parent=35 // pred_check
          %p241 = pneg %p46
        $region38: #{tpu_custom_call.1} parent=35 // pred_check_branch
          %243 = sbr.rel (%p241) target = $region40
        $region39: #{tpu_custom_call.1} parent=35 // pred_region
          %245 = dma.done %s237, 128
        $region40: #{tpu_custom_call.1} parent=35 // pred_fallthru
          _
        %s246 = sand.u32 %s25, 1
        %s247 = scalar_lea.sflag [#allocation6], %s246
        %s248 = sand.u32 %s59, 1
        %s249 = smul.addr %s248, 8
        %s250 = scalar_lea.vmem [#allocation5], %s249
        // Predicated region
        $region41: #{tpu_custom_call.1} parent=35 // pred_check
          %p251 = pneg %p72
        $region42: #{tpu_custom_call.1} parent=35 // pred_check_branch
          %253 = sbr.rel (%p251) target = $region44
        $region43: #{tpu_custom_call.1} parent=35 // pred_region
          %255 = dma.done %s247, 128
        $region44: #{tpu_custom_call.1} parent=35 // pred_fallthru
          _
        // Predicated region
        $region45: #{tpu_custom_call.1} parent=35 // pred_check
          %p256 = pneg %p93
        $region46: #{tpu_custom_call.1} parent=35 // pred_check_branch
          %258 = sbr.rel (%p256) target = $region48
        $region47: #{tpu_custom_call.1} parent=35 // pred_region
          %260 = dma.done [#allocation6], 1024
        $region48: #{tpu_custom_call.1} parent=35 // pred_fallthru
          _
        // Predicated region
        $region49: #{tpu_custom_call.1} parent=35 // pred_check
          %p261 = pneg %p114
        $region50: #{tpu_custom_call.1} parent=35 // pred_check_branch
          %263 = sbr.rel (%p261) target = $region52
        $region51: #{tpu_custom_call.1} parent=35 // pred_region
          %265 = dma.done [#allocation9], 64
        $region52: #{tpu_custom_call.1} parent=35 // pred_fallthru
          _
        %s266 = sand.u32 %s33, 1
        %s267 = scalar_lea.sflag [#allocation3], %s266
        %s268 = sand.u32 %s33, 1
        %s269 = smul.addr %s268, 8
        %s270 = scalar_lea.vmem [#allocation2], %s269
        %p271 = pneg %p46
        %p272 = pneg %p43
        %s273 = sand.u32 %s25, 1
        %s274 = scalar_lea.sflag [#allocation6], %s273
        %s275 = sand.u32 %s59, 1
        %s276 = smul.addr %s275, 8
        %s277 = scalar_lea.vmem [#allocation5], %s276
        %p278 = pneg %p72
        %p279 = pneg %p69
        %p280 = pneg %p93
        %p281 = pneg %p90
        %p282 = pneg %p114
        %p283 = pneg %p111
        %p284 = pneg %p140
        %p285 = pneg %p137
        %s286 = sand.u32 %s127, 1
        %s287 = scalar_lea.sflag [#allocation4], %s286
        %s288 = sand.u32 %s127, 1
        %s289 = smul.addr %s288, 8
        %s290 = scalar_lea.vmem [#allocation10], %s289
        %s291 = smul.u32 2, %s25
        %s292 = smul.u32 2, %s25
        %s293 = smul.u32 2, %s25
        %v294 = vld [vmem:[%s240] sm:$0xf]
        %v295 = vld [vmem:[%s240 + $0x4] sm:$0xf]
        %v296 = vld [vmem:[#allocation7] sm:$0xf]
        %v297 = vld [vmem:[#allocation7 + $0x4] sm:$0xf]
        %v298 = vld [vmem:[#allocation7 + $0x8] sm:$0xf]
        %v299 = vld [vmem:[#allocation7 + $0xc] sm:$0xf]
        %v300 = vld [vmem:[#allocation7 + $0x10] sm:$0xf]
        %v301 = vld [vmem:[#allocation7 + $0x14] sm:$0xf]
        %v302 = vld [vmem:[#allocation7 + $0x18] sm:$0xf]
        %v303 = vld [vmem:[#allocation7 + $0x1c] sm:$0xf]
        %v304 = vld [vmem:[#allocation7 + $0x20] sm:$0xf]
        %v305 = vld [vmem:[#allocation7 + $0x24] sm:$0xf]
        %v306 = vld [vmem:[#allocation7 + $0x28] sm:$0xf]
        %v307 = vld [vmem:[#allocation7 + $0x2c] sm:$0xf]
        %v308 = vld [vmem:[#allocation7 + $0x30] sm:$0xf]
        %v309 = vld [vmem:[#allocation7 + $0x34] sm:$0xf]
        %v310 = vld [vmem:[#allocation7 + $0x38] sm:$0xf]
        %v311 = vld [vmem:[#allocation7 + $0x3c] sm:$0xf]
        %v312 = vld [vmem:[#allocation8] sm:$0x1]
        %v313 = vperm.slane %v312, 0
        %v316 = vunpack.c.l.b16 %v294
        %v317 = vunpack.c.l.b16 %v295
        %v318 = vpack.c.b16 %v317, %v316
        %v336 = vunpack.c.l.b16 %v296
        %v337 = vunpack.c.l.b16 %v297
        %v338 = vunpack.c.l.b16 %v298
        %v339 = vunpack.c.l.b16 %v299
        %v340 = vunpack.c.l.b16 %v300
        %v341 = vunpack.c.l.b16 %v301
        %v342 = vunpack.c.l.b16 %v302
        %v343 = vunpack.c.l.b16 %v303
        %v344 = vunpack.c.l.b16 %v304
        %v345 = vunpack.c.l.b16 %v305
        %v346 = vunpack.c.l.b16 %v306
        %v347 = vunpack.c.l.b16 %v307
        %v348 = vunpack.c.l.b16 %v308
        %v349 = vunpack.c.l.b16 %v309
        %v350 = vunpack.c.l.b16 %v310
        %v351 = vunpack.c.l.b16 %v311
        %v352 = vpack.c.b16 %v337, %v336
        %v353 = vpack.c.b16 %v339, %v338
        %v354 = vpack.c.b16 %v341, %v340
        %v355 = vpack.c.b16 %v343, %v342
        %v356 = vpack.c.b16 %v345, %v344
        %v357 = vpack.c.b16 %v347, %v346
        %v358 = vpack.c.b16 %v349, %v348
        %v359 = vpack.c.b16 %v351, %v350
        %368 = vmatpush.bf16.msra.mxu0 %v359
        %369 = vmatpush.bf16.msra.mxu0 %v358
        %370 = vmatpush.bf16.msra.mxu0 %v357
        %371 = vmatpush.bf16.msra.mxu0 %v356
        %372 = vmatpush.bf16.msra.mxu0 %v355
        %373 = vmatpush.bf16.msra.mxu0 %v354
        %374 = vmatpush.bf16.msra.mxu0 %v353
        %375 = vmatpush.bf16.msra.mxu0 %v352
        %376 = vmatmul.bf16.gmra.mxu0 %v318
        %v377 = vpop.f32.mrf.mxu0
        %v378 = vadd.f32 %v313, %v377
        %v379 = vpop.f32.mrf.mxu0
        %v380 = vadd.f32 %v313, %v379
        %381 = vdwg.mxu0
        %v382 = vld [vmem:[%s250] sm:$0xf]
        %v383 = vld [vmem:[%s250 + $0x4] sm:$0xf]
        %v384 = vunpack.c.l.bf16 %v382
        %v385 = vunpack.c.l.bf16 %v383
        %v386 = vadd.f32 %v378, %v384
        %v387 = vadd.f32 %v380, %v385
        %388 = vadd.xlane.f32.xlu0 %v386
        %v389 = vpop.xlane.xlu0 %388
        %390 = vadd.xlane.f32.xlu0 %v387
        %v391 = vpop.xlane.xlu0 %390
        %v392 = vrcp.pop 128.0
        %v393 = vmul.f32 128.0, %v392
        %v394 = vsub.f32 1.0, %v393
        %v395 = vmul.f32 %v392, %v394
        %v396 = vadd.f32 %v392, %v395
        %vm397 = vweird.f32 %v392
        %v398 = vsel %vm397, %v392, %v396
        %v399 = vmul.f32 %v389, %v398
        %v400 = vmul.f32 %v391, %v398
        %v401 = vsub.f32 %v386, %v399
        %v402 = vsub.f32 %v387, %v400
        %v403 = vmul.f32 %v401, %v401
        %v404 = vmul.f32 %v402, %v402
        %405 = vadd.xlane.f32.xlu0 %v403
        %v406 = vpop.xlane.xlu0 %405
        %407 = vadd.xlane.f32.xlu0 %v404
        %v408 = vpop.xlane.xlu0 %407
        %v409 = vmul.f32 %v406, %v398
        %v410 = vmul.f32 %v408, %v398
        %v411 = vadd.f32 %v409, 1e-12
        %v412 = vadd.f32 %v410, 1e-12
        %v413 = vrsqrt.pop %v411
        %v414 = vmul.f32 %v413, %v411
        %v415 = vmul.f32 %v414, %v413
        %v416 = vmul.f32 0.5, %v415
        %v417 = vsub.f32 1.5, %v416
        %v418 = vmul.f32 %v413, %v417
        %vm419 = vweird.f32 %v411
        %vm420 = vweird.f32 %v413
        %vm421 = vmor %vm419, %vm420
        %v422 = vsel %vm421, %v413, %v418
        %v423 = vrsqrt.pop %v412
        %v424 = vmul.f32 %v423, %v412
        %v425 = vmul.f32 %v424, %v423
        %v426 = vmul.f32 0.5, %v425
        %v427 = vsub.f32 1.5, %v426
        %v428 = vmul.f32 %v423, %v427
        %vm429 = vweird.f32 %v412
        %vm430 = vweird.f32 %v423
        %vm431 = vmor %vm429, %vm430
        %v432 = vsel %vm431, %v423, %v428
        %v433 = vmul.f32 %v401, %v422
        %v434 = vmul.f32 %v402, %v432
        %v435 = vld [vmem:[#allocation8 + $0x1] sm:$0x1]
        %v436 = vperm.slane %v435, 0
        %v437 = vmul.f32 %v436, %v433
        %v438 = vmul.f32 %v436, %v434
        %v439 = vld [vmem:[#allocation8 + $0x2] sm:$0x1]
        %v440 = vperm.slane %v439, 0
        %v441 = vadd.f32 %v437, %v440
        %v442 = vadd.f32 %v438, %v440
        %v443 = vpack.c.bf16 %v441, %v441
        %v444 = vpack.c.bf16 %v442, %v442
        %445 = vst [vmem:[%s290] sm:$0xf] %v443
        %446 = vst [vmem:[%s290 + $0x4] sm:$0xf] %v444
        %s447 = sand.u32 %s127, 1
        %s448 = scalar_lea.sflag [#allocation4], %s447
        %s449 = sand.u32 %s127, 1
        %s450 = smul.addr %s449, 8
        %s451 = scalar_lea.vmem [#allocation10], %s450
        // Predicated region
        $region53: #{tpu_custom_call.1} parent=35 // pred_check
          %p452 = pneg %p137
        $region54: #{tpu_custom_call.1} parent=35 // pred_check_branch
          %454 = sbr.rel (%p452) target = $region56
        $region55: #{tpu_custom_call.1} parent=35 // pred_region
          %s455 = smul.u32 2, %s25
          %457 = vsyncadd %s448, 0
          %s458 = smul.addr %s455, 4
          %s459 = scalar_lea.hbm %s4, %s458
          %s460 = sshll.u32 %s451, 4
          %s461 = int_to_ptr.vmem [resolvable:$true] %s460
          %s462 = sshll.u32 %s459, 4
          %s463 = int_to_ptr.hbm [resolvable:$true] %s462
          %468 = dma.vmem_to_hbm [thread:$0]  %s461, 128, %s463, %s448, 64, 64, 4
        $region56: #{tpu_custom_call.1} parent=35 // pred_fallthru
          _
      $region36: #{tpu_custom_call.1} parent=5 // pred_fallthru
        _
      %p469 = scmp.le.s32.totalorder 2, %s20
      // Predicated region
      $region57: #{tpu_custom_call.1} parent=5 // pred_check
        %p470 = pneg %p469
      $region58: #{tpu_custom_call.1} parent=5 // pred_check_branch
        %472 = sbr.rel (%p470) target = $region60
      $region59: #{tpu_custom_call.1} parent=5 // pred_region
        %s473 = ssub.s32 %s20, 2
        // Predicated region
        $region61: #{tpu_custom_call.1} parent=59 // pred_check
          %p474 = pneg %p143
        $region62: #{tpu_custom_call.1} parent=59 // pred_check_branch
          %476 = sbr.rel (%p474) target = $region64
        $region63: #{tpu_custom_call.1} parent=59 // pred_region
          %s477 = sand.u32 %s128, 1
          %s478 = scalar_lea.sflag [#allocation4], %s477
          %s479 = sand.u32 %s128, 1
          %s480 = smul.addr %s479, 8
          %s481 = scalar_lea.vmem [#allocation10], %s480
          %483 = dma.done %s478, 128
        $region64: #{tpu_custom_call.1} parent=59 // pred_fallthru
          _
      $region60: #{tpu_custom_call.1} parent=5 // pred_fallthru
        _
    $region6: #{tpu_custom_call.1} parent=1 // loop_footer
      %s24 = sadd.s32 1, %s20
    $region7: #{tpu_custom_call.1} parent=1 // loop_footer_branch
      %19 = sbr.rel target = $region3
    $region8: #{tpu_custom_call.1} parent=1 // loop_exit
      _
    %484 = vsyncpa [#allocation3], 1
    %s485 = scalar_lea.sflag [#allocation3], 1
    %486 = vsyncpa %s485, 1
    %487 = vsyncpa [#allocation6], 1
    %s488 = scalar_lea.sflag [#allocation6], 1
    %489 = vsyncpa %s488, 1
    %490 = vsyncpa [#allocation9], 1
    %491 = vsyncpa [#allocation4], 1
    %s492 = scalar_lea.sflag [#allocation4], 1
    %493 = vsyncpa %s492, 1

</llo_original>
